<compile_context>
chip_gen: v7x
topology: tpu7x:2x2x1
jax: 0.10.0
libtpu: 0.0.40
codegen_flags: <defaults>
</compile_context>

<pallas_src>
import math

import jax
import jax.numpy as jnp
from jax.experimental import pallas as pl
from jax.experimental.pallas import tpu as pltpu


# --------------------------------------------------------------------------- #
# Kernel
# --------------------------------------------------------------------------- #
def boundary_detector_kernel(x_ref,    # (TB, I)  batch tile of x (any float dtype)
                             h_ref,    # (TB, H)  batch tile of h (any float dtype)
                             wi_ref,   # (1, I)   folded vs @ Wsi, f32, resident
                             wh_ref,   # (1, H)   folded vs @ Wsh, f32, resident
                             thr_ref,  # (1, 1)   -(vs·bias), f32, SMEM scalar
                             out_ref): # (TB, 1)  binary gate
    x = x_ref[...].astype(jnp.float32)                       # f32 accumulate
    h = h_ref[...].astype(jnp.float32)
    # Lane-major weight rows: VPU broadcast-multiply + XLU cross-lane reduce.
    zv = (jnp.sum(x * wi_ref[...], axis=-1, keepdims=True)
          + jnp.sum(h * wh_ref[...], axis=-1, keepdims=True))  # (TB, 1) f32
    # BinaryGate, eval mode:  1[sigmoid(zv + vs·bias) > 0.5]  ==  1[zv > -(vs·bias)]
    out_ref[...] = (zv > thr_ref[0, 0]).astype(out_ref.dtype)


# --------------------------------------------------------------------------- #
# Parameter folding (hoist out of the per-step path, e.g. outside an RNN scan)
# --------------------------------------------------------------------------- #
def fold_boundary_detector_params(params):
    """Fold {Wsi (S,I), Wsh (S,H), bias (S,), vs (1,S)} into lane-major rows."""
    vs = params["vs"].astype(jnp.float32)                          # (1, S)
    wi_row = vs @ params["Wsi"].astype(jnp.float32)                # (1, I) = (Wsi^T vs^T)^T
    wh_row = vs @ params["Wsh"].astype(jnp.float32)                # (1, H)
    bv = vs @ params["bias"].astype(jnp.float32).reshape(-1, 1)    # (1, 1) = vs·bias
    return {"wi_row": wi_row, "wh_row": wh_row, "neg_bias": -bv}


# --------------------------------------------------------------------------- #
# VMEM-budget-aware batch-tile selection
# --------------------------------------------------------------------------- #
def _round_up(a, m):
    return (a + m - 1) // m * m


def _vmem_capacity_bytes():
    try:
        return int(pltpu.get_tpu_info().vmem_capacity_bytes)
    except Exception:
        return 64 * 1024 * 1024  # conservative: v7x has 64 MiB per TensorCore


def _choose_batch_tile(batch, i_features, h_features, x_dtype, h_dtype):
    cap = _vmem_capacity_bytes()
    # Use at most half the physical VMEM so double-buffering + compiler scratch
    # always have headroom (v7x: 64 MiB/TC -> 32 MiB; v5e/v6e: 128 MiB -> 64 MiB).
    vmem_limit = min(cap // 2, 64 * 1024 * 1024)
    budget = max(vmem_limit * 3 // 4 - (1 << 20), 1 << 20)  # reserve for resident weights

    i_pad = _round_up(i_features, 128)
    h_pad = _round_up(h_features, 128)
    bytes_per_row = (
        2 * i_pad * jnp.dtype(x_dtype).itemsize     # x tile, double-buffered
        + 2 * h_pad * jnp.dtype(h_dtype).itemsize   # h tile, double-buffered
        + 2 * 128 * 4                               # (tb,1) f32 output, lane-padded
    )
    max_tb = budget // bytes_per_row
    max_tb = max(8, (max_tb // 8) * 8)   # sublane-aligned
    max_tb = min(max_tb, 8192)           # diminishing returns past ~86% of HBM roofline

    tb = _round_up(batch, 8) if batch <= max_tb else max_tb
    return int(tb), int(vmem_limit)


# --------------------------------------------------------------------------- #
# Wrapper
# --------------------------------------------------------------------------- #
def boundary_detector_forward(x, h, folded, *, batch_tile=None):
    """Eval-mode BoundaryDetector forward.

    x: (B, i_features), h: (B, h_features) — float32 or bfloat16 (bf16 halves
    the HBM traffic of this memory-bound kernel; accumulation stays f32).
    folded: output of fold_boundary_detector_params().
    Returns the binary gate, shape (B, 1) float32 of {0, 1}.
    """
    B, I = x.shape
    Bh, H = h.shape
    assert Bh == B

    wi_row = folded["wi_row"]
    wh_row = folded["wh_row"]
    neg_bias = folded["neg_bias"]

    tb, vmem_limit = _choose_batch_tile(B, I, H, x.dtype, h.dtype)
    if batch_tile is not None:
        tb = int(batch_tile)

    # Pad awkward batch sizes up to a multiple of the tile instead of shrinking
    # the tile (tiny tiles pay ~0.35 µs/step grid overhead against ~nothing).
    Bp = _round_up(B, tb)
    if Bp != B:
        x = jnp.pad(x, ((0, Bp - B), (0, 0)))
        h = jnp.pad(h, ((0, Bp - B), (0, 0)))

    out = pl.pallas_call(
        boundary_detector_kernel,
        out_shape=jax.ShapeDtypeStruct((Bp, 1), jnp.float32),
        grid_spec=pltpu.PrefetchScalarGridSpec(
            num_scalar_prefetch=0,
            grid=(Bp // tb,),
            in_specs=[
                pl.BlockSpec((tb, I), lambda b: (b, 0)),   # x tile (streamed)
                pl.BlockSpec((tb, H), lambda b: (b, 0)),   # h tile (streamed)
                pl.BlockSpec((1, I), lambda b: (0, 0)),    # folded vs·Wsi row (resident)
                pl.BlockSpec((1, H), lambda b: (0, 0)),    # folded vs·Wsh row (resident)
                pl.BlockSpec(memory_space=pltpu.MemorySpace.SMEM),  # threshold scalar
            ],
            out_specs=pl.BlockSpec((tb, 1), lambda b: (b, 0)),
        ),
        compiler_params=pltpu.CompilerParams(
            # Independent batch tiles: double-buffered HBM->VMEM streaming, and
            # megacore-shardable on v7x.  (CORE_PARALLEL is a possible sweep.)
            dimension_semantics=("parallel",),
            vmem_limit_bytes=vmem_limit,
        ),
    )(x, h, wi_row, wh_row, neg_bias)

    return out[:B]


# --------------------------------------------------------------------------- #
# Pure-JAX reference of the PyTorch forward (eval mode) for validation
# --------------------------------------------------------------------------- #
def boundary_detector_reference(x, h, params):
    xf = x.astype(jnp.float32)
    hf = h.astype(jnp.float32)
    z = xf @ params["Wsi"].T + hf @ params["Wsh"].T + params["bias"]
    zv = z @ params["vs"].T
    gate = (jax.nn.sigmoid(zv) > 0.5).astype(jnp.float32)
    return gate, zv


# --------------------------------------------------------------------------- #
# Demo / self-test
# --------------------------------------------------------------------------- #
if __name__ == "__main__":
    batch = 64          # fills sublanes
    i_features = 128    # lane-aligned feature widths
    h_features = 128
    s_features = 16     # detector mid width (folded away outside the kernel)

    key = jax.random.PRNGKey(0)
    kx, kh, kp = jax.random.split(key, 3)
    x32 = jax.random.normal(kx, (batch, i_features), jnp.float32)
    h32 = jax.random.normal(kh, (batch, h_features), jnp.float32)
    # bf16 inputs halve HBM traffic of this memory-bound kernel; accumulation
    # inside the kernel (and in the reference) stays f32.
    x = x32.astype(jnp.bfloat16)
    h = h32.astype(jnp.bfloat16)

    # Parameter init mirroring BoundaryDetector.reset_parameters().
    stdv = 1.0 / math.sqrt(i_features)
    ks = jax.random.split(kp, 4)
    u = lambda k, shape: jax.random.uniform(k, shape, jnp.float32, -stdv, stdv)
    params = {
        "Wsi": u(ks[0], (s_features, i_features)),
        "Wsh": u(ks[1], (s_features, h_features)),
        "bias": u(ks[2], (s_features,)),
        "vs": u(ks[3], (1, s_features)),
    }

    # One-time fold (outside the per-step path).
    folded = fold_boundary_detector_params(params)

    out = boundary_detector_forward(x, h, folded)
    out = jax.block_until_ready(out)
    assert out.shape == (batch, 1)

    ref_gate, zv_ref = boundary_detector_reference(x, h, params)
    # Exact match expected up to FP reassociation right at the decision boundary.
    ambiguous = jnp.abs(zv_ref) < 1e-4
    assert bool(jnp.all((out == ref_gate) | ambiguous)), "gate mismatch vs reference"

    # Exercise the pad-to-tile path with an awkward batch size.
    xb, hb = x[:37], h[:37]
    out2 = jax.block_until_ready(boundary_detector_forward(xb, hb, folded))
    assert out2.shape == (37, 1)
    ref2, zv2 = boundary_detector_reference(xb, hb, params)
    assert bool(jnp.all((out2 == ref2) | (jnp.abs(zv2) < 1e-4))), "gate mismatch (padded path)"

    print("KERNEL_OK")
</pallas_src>

<mosaic_0001>
module attributes {stable_mosaic.version = 11 : i64} {
  func.func @boundary_detector_kernel(%arg0: i32, %arg1: memref<64x128xbf16, #tpu.memory_space<vmem>>, %arg2: memref<64x128xbf16, #tpu.memory_space<vmem>>, %arg3: memref<1x128xf32, #tpu.memory_space<vmem>>, %arg4: memref<1x128xf32, #tpu.memory_space<vmem>>, %arg5: memref<1x1xf32, #tpu.memory_space<smem>>, %arg6: memref<64x1xf32, #tpu.memory_space<vmem>>) attributes {dimension_semantics = [#tpu.dimension_semantics<parallel>], iteration_bounds = array<i64: 1>, scalar_prefetch = 0 : i64, scratch_operands = 0 : i64, tpu.core_type = #tpu.core_type<tc>, window_params = [{transform_indices = @transform_0, window_bounds = array<i64: 64, 128>}, {transform_indices = @transform_1, window_bounds = array<i64: 64, 128>}, {pipeline_mode = #tpu.pipeline_mode<synchronous>, transform_indices = @transform_2, window_bounds = array<i64: 1, 128>}, {pipeline_mode = #tpu.pipeline_mode<synchronous>, transform_indices = @transform_3, window_bounds = array<i64: 1, 128>}, {transform_indices = @transform_4, window_bounds = array<i64: 1, 1>}, {transform_indices = @transform_5, window_bounds = array<i64: 64, 1>}]} {
    %c0 = arith.constant 0 : index
    %c0_0 = arith.constant 0 : index
    %0 = vector.load %arg1[%c0, %c0_0] : memref<64x128xbf16, #tpu.memory_space<vmem>>, vector<64x128xbf16>
    %1 = arith.extf %0 : vector<64x128xbf16> to vector<64x128xf32>
    %c0_1 = arith.constant 0 : index
    %c0_2 = arith.constant 0 : index
    %2 = vector.load %arg2[%c0_1, %c0_2] : memref<64x128xbf16, #tpu.memory_space<vmem>>, vector<64x128xbf16>
    %3 = arith.extf %2 : vector<64x128xbf16> to vector<64x128xf32>
    %c0_3 = arith.constant 0 : index
    %c0_4 = arith.constant 0 : index
    %4 = vector.load %arg3[%c0_3, %c0_4] : memref<1x128xf32, #tpu.memory_space<vmem>>, vector<1x128xf32>
    %5 = vector.broadcast %4 : vector<1x128xf32> to vector<64x128xf32>
    %6 = arith.mulf %1, %5 : vector<64x128xf32>
    %cst = arith.constant dense<0.000000e+00> : vector<64xf32>
    %7 = vector.multi_reduction <add>, %6, %cst [1] : vector<64x128xf32> to vector<64xf32>
    %8 = vector.shape_cast %7 : vector<64xf32> to vector<64x1xf32>
    %c0_5 = arith.constant 0 : index
    %c0_6 = arith.constant 0 : index
    %9 = vector.load %arg4[%c0_5, %c0_6] : memref<1x128xf32, #tpu.memory_space<vmem>>, vector<1x128xf32>
    %10 = vector.broadcast %9 : vector<1x128xf32> to vector<64x128xf32>
    %11 = arith.mulf %3, %10 : vector<64x128xf32>
    %cst_7 = arith.constant dense<0.000000e+00> : vector<64xf32>
    %12 = vector.multi_reduction <add>, %11, %cst_7 [1] : vector<64x128xf32> to vector<64xf32>
    %13 = vector.shape_cast %12 : vector<64xf32> to vector<64x1xf32>
    %14 = arith.addf %8, %13 : vector<64x1xf32>
    %c0_8 = arith.constant 0 : index
    %c0_9 = arith.constant 0 : index
    %15 = memref.load %arg5[%c0_8, %c0_9] : memref<1x1xf32, #tpu.memory_space<smem>>
    %16 = vector.broadcast %15 : f32 to vector<64x1xf32>
    %17 = arith.cmpf ogt, %14, %16 : vector<64x1xf32>
    %18 = arith.extui %17 : vector<64x1xi1> to vector<64x1xi32>
    %19 = arith.sitofp %18 : vector<64x1xi32> to vector<64x1xf32>
    %c0_10 = arith.constant 0 : index
    %c0_11 = arith.constant 0 : index
    %20 = vector.load %arg6[%c0_10, %c0_11] : memref<64x1xf32, #tpu.memory_space<vmem>>, vector<64x1xf32>
    tpu.vector_store %arg6[%c0_10, %c0_11], %19 {strides = array<i32>} : memref<64x1xf32, #tpu.memory_space<vmem>>, vector<64x1xf32>,
    return
  }
  func.func @transform_0(%arg0: i32) -> (i32, i32) {
    %c0_i32 = arith.constant 0 : i32
    %c0_i32_0 = arith.constant 0 : i32
    return %arg0, %c0_i32 : i32, i32
  }
  func.func @transform_1(%arg0: i32) -> (i32, i32) {
    %c0_i32 = arith.constant 0 : i32
    %c0_i32_0 = arith.constant 0 : i32
    return %arg0, %c0_i32 : i32, i32
  }
  func.func @transform_2(%arg0: i32) -> (i32, i32) {
    %c0_i32 = arith.constant 0 : i32
    %c0_i32_0 = arith.constant 0 : i32
    %c0_i32_1 = arith.constant 0 : i32
    return %c0_i32, %c0_i32_0 : i32, i32
  }
  func.func @transform_3(%arg0: i32) -> (i32, i32) {
    %c0_i32 = arith.constant 0 : i32
    %c0_i32_0 = arith.constant 0 : i32
    %c0_i32_1 = arith.constant 0 : i32
    return %c0_i32, %c0_i32_0 : i32, i32
  }
  func.func @transform_4(%arg0: i32) -> (i32, i32) {
    %c0_i32 = arith.constant 0 : i32
    %c0_i32_0 = arith.constant 0 : i32
    %c0_i32_1 = arith.constant 0 : i32
    return %c0_i32, %c0_i32_0 : i32, i32
  }
  func.func @transform_5(%arg0: i32) -> (i32, i32) {
    %c0_i32 = arith.constant 0 : i32
    %c0_i32_0 = arith.constant 0 : i32
    return %arg0, %c0_i32 : i32, i32
  }
}

</mosaic_0001>

<llo_original>
// kernel: tpu_custom_call.1
$region0: #{tpu_custom_call.1}
  #allocation0 [shape = 'u32[]', space=smem, size = 0x4, offset = 0x4, fixed_abs, tag = 'smem constant byte address 0x4 - core index']
  #allocation1 [shape = 'u32[144,128]{1,0:T(1,128)}', space=vmem, size = 0x12000, scoped, tag = 'internal scratch']
  #allocation2 [shape = 'f32[1,1]{1,0:T(1,128)S(6)}', space=smem, size = 0x200, scoped, tag = 'scoped memory for tpu_custom_call.1']
  %s0 = inlined_call_operand.hbm [shape: bf16[64,128], index: 0, kind: input, shape index: {}]
  %s1 = inlined_call_operand.hbm [shape: bf16[64,128], index: 1, kind: input, shape index: {}]
  %s2 = inlined_call_operand.vmem [shape: f32[1,128], index: 2, kind: input, shape index: {}]
  %s3 = inlined_call_operand.vmem [shape: f32[1,128], index: 3, kind: input, shape index: {}]
  %s4 = inlined_call_operand.<no memory space> [shape: f32[1,1], index: 4, kind: input, shape index: {}]
  %s5 = inlined_call_operand.vmem [shape: f32[64,1], index: 5, kind: output, shape index: {}]
  %s6 = sld [smem:[#allocation0]]
  $region38: #{tpu_custom_call.1} parent=0
    _
  %s8 = ssub.s32 1, %s6
  %s9 = scalar_select 0, %s8, %s6
  %10 = sst [smem:[#allocation2]] %s4
  $region1: #{tpu_custom_call.1} parent=0
    #allocation3 [shape = 'u8[16384]{0}', space=vmem, size = 0x4000, scoped, tag = 'input window, operand 0, single buffered']
    #allocation4 [shape = 's32[1]{0}', space=sflag, size = 0x4, scoped, tag = 'scoped memory for tpu_custom_call.1']
    #allocation5 [shape = 'u8[16384]{0}', space=vmem, size = 0x4000, scoped, tag = 'input window, operand 1, single buffered']
    #allocation6 [shape = 's32[1]{0}', space=sflag, size = 0x4, scoped, tag = 'scoped memory for tpu_custom_call.1']
    %11 = vsyncpa [#allocation4], 0
    %12 = vsyncpa [#allocation6], 0
    // Predicated region
    $region2: #{tpu_custom_call.1} parent=1 // pred_check
      _
    $region3: #{tpu_custom_call.1} parent=1 // pred_check_branch
      %14 = sbr.rel (0) target = $region5
    $region4: #{tpu_custom_call.1} parent=1 // pred_region
      %s16 = ssub.s32 512, 512
      %17 = vsyncadd [#allocation4], %s16
      %s18 = sshll.u32 [#allocation3], 4
      %s19 = int_to_ptr.vmem [resolvable:$true] %s18
      %24 = dma.hbm_to_vmem [thread:$0]  %s0, 512, %s19, [#allocation4], 64, 64, 4
    $region5: #{tpu_custom_call.1} parent=1 // pred_fallthru
      _
    // Predicated region
    $region6: #{tpu_custom_call.1} parent=1 // pred_check
      _
    $region7: #{tpu_custom_call.1} parent=1 // pred_check_branch
      %26 = sbr.rel (0) target = $region9
    $region8: #{tpu_custom_call.1} parent=1 // pred_region
      %s28 = ssub.s32 512, 512
      %29 = vsyncadd [#allocation6], %s28
      %s30 = sshll.u32 [#allocation5], 4
      %s31 = int_to_ptr.vmem [resolvable:$true] %s30
      %36 = dma.hbm_to_vmem [thread:$0]  %s1, 512, %s31, [#allocation6], 64, 64, 4
    $region9: #{tpu_custom_call.1} parent=1 // pred_fallthru
      _
    // Predicated region
    $region10: #{tpu_custom_call.1} parent=1 // pred_check
      _
    $region11: #{tpu_custom_call.1} parent=1 // pred_check_branch
      %38 = sbr.rel (0) target = $region13
    $region12: #{tpu_custom_call.1} parent=1 // pred_region
      _
    $region13: #{tpu_custom_call.1} parent=1 // pred_fallthru
      _
    // Predicated region
    $region14: #{tpu_custom_call.1} parent=1 // pred_check
      _
    $region15: #{tpu_custom_call.1} parent=1 // pred_check_branch
      %40 = sbr.rel (0) target = $region17
    $region16: #{tpu_custom_call.1} parent=1 // pred_region
      _
    $region17: #{tpu_custom_call.1} parent=1 // pred_fallthru
      _
    // Predicated region
    $region18: #{tpu_custom_call.1} parent=1 // pred_check
      _
    $region19: #{tpu_custom_call.1} parent=1 // pred_check_branch
      %42 = sbr.rel (0) target = $region21
    $region20: #{tpu_custom_call.1} parent=1 // pred_region
      _
    $region21: #{tpu_custom_call.1} parent=1 // pred_fallthru
      _
    // Predicated region
    $region22: #{tpu_custom_call.1} parent=1 // pred_check
      _
    $region23: #{tpu_custom_call.1} parent=1 // pred_check_branch
      %44 = sbr.rel (0) target = $region25
    $region24: #{tpu_custom_call.1} parent=1 // pred_region
      %45 = dma.done [#allocation4], 512
    $region25: #{tpu_custom_call.1} parent=1 // pred_fallthru
      _
    // Predicated region
    $region26: #{tpu_custom_call.1} parent=1 // pred_check
      _
    $region27: #{tpu_custom_call.1} parent=1 // pred_check_branch
      %47 = sbr.rel (0) target = $region29
    $region28: #{tpu_custom_call.1} parent=1 // pred_region
      %48 = dma.done [#allocation6], 512
    $region29: #{tpu_custom_call.1} parent=1 // pred_fallthru
      _
    %v49 = vld [vmem:[#allocation3] sm:$0xf]
    %v50 = vld [vmem:[#allocation3 + $0x4] sm:$0xf]
    %v51 = vld [vmem:[#allocation3 + $0x8] sm:$0xf]
    %v52 = vld [vmem:[#allocation3 + $0xc] sm:$0xf]
    %v53 = vld [vmem:[#allocation3 + $0x10] sm:$0xf]
    %v54 = vld [vmem:[#allocation3 + $0x14] sm:$0xf]
    %v55 = vld [vmem:[#allocation3 + $0x18] sm:$0xf]
    %v56 = vld [vmem:[#allocation3 + $0x1c] sm:$0xf]
    %v57 = vunpack.c.l.bf16 %v49
    %v58 = vunpack.c.l.bf16 %v50
    %v59 = vunpack.c.l.bf16 %v51
    %v60 = vunpack.c.l.bf16 %v52
    %v61 = vunpack.c.l.bf16 %v53
    %v62 = vunpack.c.l.bf16 %v54
    %v63 = vunpack.c.l.bf16 %v55
    %v64 = vunpack.c.l.bf16 %v56
    %v65 = vld [vmem:[#allocation5] sm:$0xf]
    %v66 = vld [vmem:[#allocation5 + $0x4] sm:$0xf]
    %v67 = vld [vmem:[#allocation5 + $0x8] sm:$0xf]
    %v68 = vld [vmem:[#allocation5 + $0xc] sm:$0xf]
    %v69 = vld [vmem:[#allocation5 + $0x10] sm:$0xf]
    %v70 = vld [vmem:[#allocation5 + $0x14] sm:$0xf]
    %v71 = vld [vmem:[#allocation5 + $0x18] sm:$0xf]
    %v72 = vld [vmem:[#allocation5 + $0x1c] sm:$0xf]
    %v73 = vunpack.c.l.bf16 %v65
    %v74 = vunpack.c.l.bf16 %v66
    %v75 = vunpack.c.l.bf16 %v67
    %v76 = vunpack.c.l.bf16 %v68
    %v77 = vunpack.c.l.bf16 %v69
    %v78 = vunpack.c.l.bf16 %v70
    %v79 = vunpack.c.l.bf16 %v71
    %v80 = vunpack.c.l.bf16 %v72
    %v81 = vld [vmem:[%s2] sm:$0x1]
    %v83 = vlaneseq
    %v84 = vshrl.u32 %v83, 7
    %v85 = vsub.s32 0, %v84
    %v86 = vrot.slane %v81, %v85
    %v88 = vmul.f32 %v57, %v86
    %v89 = vmul.f32 %v58, %v86
    %v90 = vmul.f32 %v59, %v86
    %v91 = vmul.f32 %v60, %v86
    %v92 = vmul.f32 %v61, %v86
    %v93 = vmul.f32 %v62, %v86
    %v94 = vmul.f32 %v63, %v86
    %v95 = vmul.f32 %v64, %v86
    %96 = vadd.xlane.f32.xlu0 %v88
    %v97 = vpop.xlane.xlu0 %96
    %98 = vadd.xlane.f32.xlu0 %v89
    %v99 = vpop.xlane.xlu0 %98
    %100 = vadd.xlane.f32.xlu0 %v90
    %v101 = vpop.xlane.xlu0 %100
    %102 = vadd.xlane.f32.xlu0 %v91
    %v103 = vpop.xlane.xlu0 %102
    %104 = vadd.xlane.f32.xlu0 %v92
    %v105 = vpop.xlane.xlu0 %104
    %106 = vadd.xlane.f32.xlu0 %v93
    %v107 = vpop.xlane.xlu0 %106
    %108 = vadd.xlane.f32.xlu0 %v94
    %v109 = vpop.xlane.xlu0 %108
    %110 = vadd.xlane.f32.xlu0 %v95
    %v111 = vpop.xlane.xlu0 %110
    %v112 = vld [vmem:[%s3] sm:$0x1]
    %v114 = vlaneseq
    %v115 = vshrl.u32 %v114, 7
    %v116 = vsub.s32 0, %v115
    %v117 = vrot.slane %v112, %v116
    %v119 = vmul.f32 %v73, %v117
    %v120 = vmul.f32 %v74, %v117
    %v121 = vmul.f32 %v75, %v117
    %v122 = vmul.f32 %v76, %v117
    %v123 = vmul.f32 %v77, %v117
    %v124 = vmul.f32 %v78, %v117
    %v125 = vmul.f32 %v79, %v117
    %v126 = vmul.f32 %v80, %v117
    %127 = vadd.xlane.f32.xlu0 %v119
    %v128 = vpop.xlane.xlu0 %127
    %129 = vadd.xlane.f32.xlu0 %v120
    %v130 = vpop.xlane.xlu0 %129
    %131 = vadd.xlane.f32.xlu0 %v121
    %v132 = vpop.xlane.xlu0 %131
    %133 = vadd.xlane.f32.xlu0 %v122
    %v134 = vpop.xlane.xlu0 %133
    %135 = vadd.xlane.f32.xlu0 %v123
    %v136 = vpop.xlane.xlu0 %135
    %137 = vadd.xlane.f32.xlu0 %v124
    %v138 = vpop.xlane.xlu0 %137
    %139 = vadd.xlane.f32.xlu0 %v125
    %v140 = vpop.xlane.xlu0 %139
    %141 = vadd.xlane.f32.xlu0 %v126
    %v142 = vpop.xlane.xlu0 %141
    %v143 = vadd.f32 %v97, %v128
    %v144 = vadd.f32 %v99, %v130
    %v145 = vadd.f32 %v101, %v132
    %v146 = vadd.f32 %v103, %v134
    %v147 = vadd.f32 %v105, %v136
    %v148 = vadd.f32 %v107, %v138
    %v149 = vadd.f32 %v109, %v140
    %v150 = vadd.f32 %v111, %v142
    %s151 = sld [smem:[#allocation2]]
    %v152 = vstv %s151
    %vm153 = vcmp.gt.f32.partialorder %v143, %v152
    %vm154 = vcmp.gt.f32.partialorder %v144, %v152
    %vm155 = vcmp.gt.f32.partialorder %v145, %v152
    %vm156 = vcmp.gt.f32.partialorder %v146, %v152
    %vm157 = vcmp.gt.f32.partialorder %v147, %v152
    %vm158 = vcmp.gt.f32.partialorder %v148, %v152
    %vm159 = vcmp.gt.f32.partialorder %v149, %v152
    %vm160 = vcmp.gt.f32.partialorder %v150, %v152
    %v161 = vsel %vm153, 1, 0
    %v162 = vsel %vm154, 1, 0
    %v163 = vsel %vm155, 1, 0
    %v164 = vsel %vm156, 1, 0
    %v165 = vsel %vm157, 1, 0
    %v166 = vsel %vm158, 1, 0
    %v167 = vsel %vm159, 1, 0
    %v168 = vsel %vm160, 1, 0
    %v169 = vcvt.s32.f32 %v161
    %v170 = vcvt.s32.f32 %v162
    %v171 = vcvt.s32.f32 %v163
    %v172 = vcvt.s32.f32 %v164
    %v173 = vcvt.s32.f32 %v165
    %v174 = vcvt.s32.f32 %v166
    %v175 = vcvt.s32.f32 %v167
    %v176 = vcvt.s32.f32 %v168
    %vm177 = vcmask 7168
    %178 = vst.msk [vmem:[%s5] sm:$0xff] %vm177, %v169
    %179 = vst.msk [vmem:[%s5 + $0x8] sm:$0xff] %vm177, %v170
    %180 = vst.msk [vmem:[%s5 + $0x10] sm:$0xff] %vm177, %v171
    %181 = vst.msk [vmem:[%s5 + $0x18] sm:$0xff] %vm177, %v172
    %182 = vst.msk [vmem:[%s5 + $0x20] sm:$0xff] %vm177, %v173
    %183 = vst.msk [vmem:[%s5 + $0x28] sm:$0xff] %vm177, %v174
    %184 = vst.msk [vmem:[%s5 + $0x30] sm:$0xff] %vm177, %v175
    %185 = vst.msk [vmem:[%s5 + $0x38] sm:$0xff] %vm177, %v176
    // Predicated region
    $region30: #{tpu_custom_call.1} parent=1 // pred_check
      _
    $region31: #{tpu_custom_call.1} parent=1 // pred_check_branch
      %187 = sbr.rel (0) target = $region33
    $region32: #{tpu_custom_call.1} parent=1 // pred_region
      _
    $region33: #{tpu_custom_call.1} parent=1 // pred_fallthru
      _
    // Predicated region
    $region34: #{tpu_custom_call.1} parent=1 // pred_check
      _
    $region35: #{tpu_custom_call.1} parent=1 // pred_check_branch
      %189 = sbr.rel (0) target = $region37
    $region36: #{tpu_custom_call.1} parent=1 // pred_region
      _
    $region37: #{tpu_custom_call.1} parent=1 // pred_fallthru
      _
    %190 = vsyncpa [#allocation4], 1
    %191 = vsyncpa [#allocation6], 1

</llo_original>
